<compile_context>
chip_gen: v7x
topology: tpu7x:2x2x1
jax: 0.10.0
libtpu: 0.0.40
codegen_flags: <defaults>
</compile_context>

<pallas_src>
import jax
import jax.numpy as jnp
from jax.experimental import pallas as pl
from jax.experimental.pallas import tpu as pltpu


def _round_up(x, m):
    return ((x + m - 1) // m) * m


def link_predictor_kernel(zs_ref, zd_ref, ws_ref, wd_ref, b_ref, wf_ref, bf_ref, out_ref):
    # Two MXU dots into one f32 accumulator (fuses lin_src / lin_dst without a
    # wrapper-side concat of the activation stream).
    h = jnp.dot(zs_ref[...], ws_ref[...], preferred_element_type=jnp.float32)
    h = h + jnp.dot(zd_ref[...], wd_ref[...], preferred_element_type=jnp.float32)
    # Bias + ReLU in f32 on the VPU (v5e VPU/EUP have no bf16).
    h = jnp.maximum(h + b_ref[...], 0.0)
    # lin_final as an MXU projection (H -> 1), f32 accumulate.
    logit = jnp.dot(h, wf_ref[...], preferred_element_type=jnp.float32)   # (tile_n, 1)
    prob = jax.nn.sigmoid(logit[:, 0] + bf_ref[0, 0])                     # (tile_n,)
    # Lane-dense store: one full (1, tile_n) row per grid step.
    out_ref[...] = prob[None, :].astype(out_ref.dtype)


def fuse_params(p, *, dtype=jnp.float32, lane_multiple=128):
    """Pre-transpose / zero-pad / cast torch-layout params ONCE (not per call)."""
    C = p["w_src"].shape[0]
    H = _round_up(C, lane_multiple)
    ws = p["w_src"].T                                   # (C, C) right-operand layout
    wd = p["w_dst"].T                                   # (C, C)
    b_cat = (p["b_src"] + p["b_dst"])[None, :]          # (1, C)
    wf = p["w_final"].T                                 # (C, 1)
    if H != C:  # zero-pad hidden dim so h / biases / wf are lane-dense (exact).
        ws = jnp.pad(ws, ((0, 0), (0, H - C)))
        wd = jnp.pad(wd, ((0, 0), (0, H - C)))
        b_cat = jnp.pad(b_cat, ((0, 0), (0, H - C)))
        wf = jnp.pad(wf, ((0, H - C), (0, 0)))
    return {
        "w_src_t": ws.astype(dtype),                    # (C, H) matmul operand
        "w_dst_t": wd.astype(dtype),                    # (C, H) matmul operand
        "b_cat": b_cat.astype(jnp.float32),             # (1, H) post-matmul math stays f32
        "wf": wf.astype(jnp.float32),                   # (H, 1) final projection
        "bf": p["b_final"].reshape(1, 1).astype(jnp.float32),  # SMEM scalar
    }


def link_predictor(z_src, z_dst, fused, *, tile_n=8192,
                   vmem_limit_bytes=48 * 1024 * 1024):
    """fused: dict from fuse_params().  Returns sigmoid probabilities, shape (N, 1) f32."""
    N, C = z_src.shape
    ws, wd = fused["w_src_t"], fused["w_dst_t"]
    b_cat, wf, bf = fused["b_cat"], fused["wf"], fused["bf"]
    H = ws.shape[1]

    # Matmul operands must share a dtype.  Weights are tiny, so this (normally
    # no-op) cast is cheap; the activations are never cast in the wrapper.
    if ws.dtype != z_src.dtype:
        ws = ws.astype(z_src.dtype)
        wd = wd.astype(z_src.dtype)

    # Row tiling: large tiles to amortize per-grid-step overhead, but keep >= 2
    # grid steps for moderate N so both v7x TensorCores get work.  No activation
    # padding: the partial last input block is masked by Pallas.
    if N < 256:
        tn = max(8, _round_up(N, 8))                    # single tile, sublane multiple
        num_tiles = 1
    else:
        tn = min(_round_up(tile_n, 128), _round_up(-(-N // 2), 128))
        tn = max(tn, 128)                               # lane-dense output blocks
        num_tiles = -(-N // tn)
    n_out = num_tiles * tn                              # all output blocks full -> unmasked stores

    out_row = pl.pallas_call(
        link_predictor_kernel,
        out_shape=jax.ShapeDtypeStruct((1, n_out), jnp.float32),
        grid=(num_tiles,),
        in_specs=[
            pl.BlockSpec((tn, C), lambda i: (i, 0)),            # z_src stream
            pl.BlockSpec((tn, C), lambda i: (i, 0)),            # z_dst stream
            pl.BlockSpec((C, H), lambda i: (0, 0)),             # W_src^T (pinned)
            pl.BlockSpec((C, H), lambda i: (0, 0)),             # W_dst^T (pinned)
            pl.BlockSpec((1, H), lambda i: (0, 0)),             # b_src + b_dst (pinned)
            pl.BlockSpec((H, 1), lambda i: (0, 0)),             # W_final^T (pinned)
            pl.BlockSpec(memory_space=pltpu.MemorySpace.SMEM),  # b_final scalar
        ],
        out_specs=pl.BlockSpec((1, tn), lambda i: (0, i)),      # lane-dense output row
        compiler_params=pltpu.CompilerParams(
            dimension_semantics=("parallel",),                  # megacore split on v7x
            vmem_limit_bytes=vmem_limit_bytes,                  # <= 48 MiB: safe on v7x's 64 MiB
        ),
    )(z_src, z_dst, ws, wd, b_cat, wf, bf)

    # Rows >= N in the padded tail are garbage (masked partial input block);
    # they are sliced off here and must never be consumed anywhere else.
    return out_row[0, :N].reshape(N, 1)


def init_params(key, in_channels):
    """torch.nn.Linear default init (uniform +-1/sqrt(fan_in)), torch (out, in) layout."""
    ks = jax.random.split(key, 6)
    bound = 1.0 / (in_channels ** 0.5)
    u = lambda k, shape: jax.random.uniform(k, shape, jnp.float32, -bound, bound)
    return {
        "w_src": u(ks[0], (in_channels, in_channels)),
        "b_src": u(ks[1], (in_channels,)),
        "w_dst": u(ks[2], (in_channels, in_channels)),
        "b_dst": u(ks[3], (in_channels,)),
        "w_final": u(ks[4], (1, in_channels)),
        "b_final": u(ks[5], (1,)),
    }


def link_predictor_ref(z_src, z_dst, p):
    h = z_src @ p["w_src"].T + p["b_src"] + z_dst @ p["w_dst"].T + p["b_dst"]
    h = jnp.maximum(h, 0.0)
    return jax.nn.sigmoid(h @ p["w_final"].T + p["b_final"])


if __name__ == "__main__":
    # Small shapes consistent with the module: N node pairs, in_channels = 32.
    N, C = 8, 32
    key = jax.random.PRNGKey(0)
    k_src, k_dst, k_par = jax.random.split(key, 3)
    z_src = jax.random.normal(k_src, (N, C), jnp.float32)
    z_dst = jax.random.normal(k_dst, (N, C), jnp.float32)
    params = init_params(k_par, C)
    fused = fuse_params(params)
    ref = link_predictor_ref(z_src, z_dst, params)

    # f32 single-tile path (exact vs reference).
    out = jax.block_until_ready(link_predictor(z_src, z_dst, fused))
    assert out.shape == (N, 1)
    assert jnp.allclose(out, ref, atol=1e-5, rtol=1e-5), (out, ref)

    # Multi-tile path: exercises the row grid, pinned weights, masked partial
    # last input block (no wrapper pad) and lane-dense output stores.
    N2 = 3000
    z2s = jax.random.normal(jax.random.PRNGKey(1), (N2, C), jnp.float32)
    z2d = jax.random.normal(jax.random.PRNGKey(2), (N2, C), jnp.float32)
    out2 = jax.block_until_ready(link_predictor(z2s, z2d, fused))
    ref2 = link_predictor_ref(z2s, z2d, params)
    assert out2.shape == (N2, 1)
    assert jnp.allclose(out2, ref2, atol=1e-5, rtol=1e-5)

    # Native-bf16 activation path (weights pre-cast once in fuse_params;
    # f32 accumulation inside the kernel) -- relaxed tolerance.
    fused_bf16 = fuse_params(params, dtype=jnp.bfloat16)
    z3s = z2s.astype(jnp.bfloat16)
    z3d = z2d.astype(jnp.bfloat16)
    out3 = jax.block_until_ready(link_predictor(z3s, z3d, fused_bf16))
    ref3 = link_predictor_ref(z3s.astype(jnp.float32), z3d.astype(jnp.float32), params)
    assert out3.shape == (N2, 1)
    assert jnp.allclose(out3, ref3, atol=2e-2)

    print("KERNEL_OK")
</pallas_src>

<mosaic_0001>
module attributes {stable_mosaic.version = 11 : i64} {
  func.func @link_predictor_kernel(%arg0: i32, %arg1: memref<8x32xf32, #tpu.memory_space<vmem>>, %arg2: memref<8x32xf32, #tpu.memory_space<vmem>>, %arg3: memref<32x128xf32, #tpu.memory_space<vmem>>, %arg4: memref<32x128xf32, #tpu.memory_space<vmem>>, %arg5: memref<1x128xf32, #tpu.memory_space<vmem>>, %arg6: memref<128x1xf32, #tpu.memory_space<vmem>>, %arg7: memref<1x1xf32, #tpu.memory_space<smem>>, %arg8: memref<1x8xf32, #tpu.memory_space<vmem>>) attributes {dimension_semantics = [#tpu.dimension_semantics<parallel>], iteration_bounds = array<i64: 1>, scalar_prefetch = 0 : i64, scratch_operands = 0 : i64, tpu.core_type = #tpu.core_type<tc>, window_params = [{transform_indices = @transform_0, window_bounds = array<i64: 8, 32>}, {transform_indices = @transform_1, window_bounds = array<i64: 8, 32>}, {pipeline_mode = #tpu.pipeline_mode<synchronous>, transform_indices = @transform_2, window_bounds = array<i64: 32, 128>}, {pipeline_mode = #tpu.pipeline_mode<synchronous>, transform_indices = @transform_3, window_bounds = array<i64: 32, 128>}, {pipeline_mode = #tpu.pipeline_mode<synchronous>, transform_indices = @transform_4, window_bounds = array<i64: 1, 128>}, {pipeline_mode = #tpu.pipeline_mode<synchronous>, transform_indices = @transform_5, window_bounds = array<i64: 128, 1>}, {transform_indices = @transform_6, window_bounds = array<i64: 1, 1>}, {transform_indices = @transform_7, window_bounds = array<i64: 1, 8>}]} {
    %c0 = arith.constant 0 : index
    %c0_0 = arith.constant 0 : index
    %0 = vector.load %arg1[%c0, %c0_0] : memref<8x32xf32, #tpu.memory_space<vmem>>, vector<8x32xf32>
    %c0_1 = arith.constant 0 : index
    %c0_2 = arith.constant 0 : index
    %1 = vector.load %arg3[%c0_1, %c0_2] : memref<32x128xf32, #tpu.memory_space<vmem>>, vector<32x128xf32>
    %cst = arith.constant dense<0.000000e+00> : vector<8x128xf32>
    %2 = tpu.matmul %0, %1, %cst {dimension_numbers = #tpu.dot_dimension_numbers<[1], [0], [0], [1], [0, 0, 1, 1], [], []>} : vector<8x32xf32>, vector<32x128xf32>, vector<8x128xf32> -> vector<8x128xf32>
    %c0_3 = arith.constant 0 : index
    %c0_4 = arith.constant 0 : index
    %3 = vector.load %arg2[%c0_3, %c0_4] : memref<8x32xf32, #tpu.memory_space<vmem>>, vector<8x32xf32>
    %c0_5 = arith.constant 0 : index
    %c0_6 = arith.constant 0 : index
    %4 = vector.load %arg4[%c0_5, %c0_6] : memref<32x128xf32, #tpu.memory_space<vmem>>, vector<32x128xf32>
    %cst_7 = arith.constant dense<0.000000e+00> : vector<8x128xf32>
    %5 = tpu.matmul %3, %4, %cst_7 {dimension_numbers = #tpu.dot_dimension_numbers<[1], [0], [0], [1], [0, 0, 1, 1], [], []>} : vector<8x32xf32>, vector<32x128xf32>, vector<8x128xf32> -> vector<8x128xf32>
    %6 = arith.addf %2, %5 : vector<8x128xf32>
    %c0_8 = arith.constant 0 : index
    %c0_9 = arith.constant 0 : index
    %7 = vector.load %arg5[%c0_8, %c0_9] : memref<1x128xf32, #tpu.memory_space<vmem>>, vector<1x128xf32>
    %8 = vector.broadcast %7 : vector<1x128xf32> to vector<8x128xf32>
    %9 = arith.addf %6, %8 : vector<8x128xf32>
    %cst_10 = arith.constant 0.000000e+00 : f32
    %10 = vector.broadcast %cst_10 : f32 to vector<8x128xf32>
    %11 = arith.maximumf %9, %10 : vector<8x128xf32>
    %c0_11 = arith.constant 0 : index
    %c0_12 = arith.constant 0 : index
    %12 = vector.load %arg6[%c0_11, %c0_12] : memref<128x1xf32, #tpu.memory_space<vmem>>, vector<128x1xf32>
    %cst_13 = arith.constant dense<0.000000e+00> : vector<8x1xf32>
    %13 = tpu.matmul %11, %12, %cst_13 {dimension_numbers = #tpu.dot_dimension_numbers<[1], [0], [0], [1], [0, 0, 1, 1], [], []>} : vector<8x128xf32>, vector<128x1xf32>, vector<8x1xf32> -> vector<8x1xf32>
    %14 = vector.shape_cast %13 : vector<8x1xf32> to vector<8xf32>
    %c0_14 = arith.constant 0 : index
    %c0_15 = arith.constant 0 : index
    %15 = memref.load %arg7[%c0_14, %c0_15] : memref<1x1xf32, #tpu.memory_space<smem>>
    %16 = vector.broadcast %15 : f32 to vector<8xf32>
    %17 = arith.addf %14, %16 : vector<8xf32>
    %18 = arith.negf %17 : vector<8xf32>
    %19 = math.exp %18 : vector<8xf32>
    %cst_16 = arith.constant 1.000000e+00 : f32
    %20 = vector.broadcast %cst_16 : f32 to vector<8xf32>
    %21 = arith.addf %20, %19 : vector<8xf32>
    %22 = arith.divf %20, %21 : vector<8xf32>
    %23 = vector.shape_cast %22 : vector<8xf32> to vector<1x8xf32>
    %c0_17 = arith.constant 0 : index
    %c0_18 = arith.constant 0 : index
    %24 = vector.load %arg8[%c0_17, %c0_18] : memref<1x8xf32, #tpu.memory_space<vmem>>, vector<1x8xf32>
    tpu.vector_store %arg8[%c0_17, %c0_18], %23 {strides = array<i32>} : memref<1x8xf32, #tpu.memory_space<vmem>>, vector<1x8xf32>,
    return
  }
  func.func @transform_0(%arg0: i32) -> (i32, i32) {
    %c0_i32 = arith.constant 0 : i32
    %c0_i32_0 = arith.constant 0 : i32
    return %arg0, %c0_i32 : i32, i32
  }
  func.func @transform_1(%arg0: i32) -> (i32, i32) {
    %c0_i32 = arith.constant 0 : i32
    %c0_i32_0 = arith.constant 0 : i32
    return %arg0, %c0_i32 : i32, i32
  }
  func.func @transform_2(%arg0: i32) -> (i32, i32) {
    %c0_i32 = arith.constant 0 : i32
    %c0_i32_0 = arith.constant 0 : i32
    %c0_i32_1 = arith.constant 0 : i32
    return %c0_i32, %c0_i32_0 : i32, i32
  }
  func.func @transform_3(%arg0: i32) -> (i32, i32) {
    %c0_i32 = arith.constant 0 : i32
    %c0_i32_0 = arith.constant 0 : i32
    %c0_i32_1 = arith.constant 0 : i32
    return %c0_i32, %c0_i32_0 : i32, i32
  }
  func.func @transform_4(%arg0: i32) -> (i32, i32) {
    %c0_i32 = arith.constant 0 : i32
    %c0_i32_0 = arith.constant 0 : i32
    %c0_i32_1 = arith.constant 0 : i32
    return %c0_i32, %c0_i32_0 : i32, i32
  }
  func.func @transform_5(%arg0: i32) -> (i32, i32) {
    %c0_i32 = arith.constant 0 : i32
    %c0_i32_0 = arith.constant 0 : i32
    %c0_i32_1 = arith.constant 0 : i32
    return %c0_i32, %c0_i32_0 : i32, i32
  }
  func.func @transform_6(%arg0: i32) -> (i32, i32) {
    %c0_i32 = arith.constant 0 : i32
    %c0_i32_0 = arith.constant 0 : i32
    %c0_i32_1 = arith.constant 0 : i32
    return %c0_i32, %c0_i32_0 : i32, i32
  }
  func.func @transform_7(%arg0: i32) -> (i32, i32) {
    %c0_i32 = arith.constant 0 : i32
    %c0_i32_0 = arith.constant 0 : i32
    return %c0_i32, %arg0 : i32, i32
  }
}

</mosaic_0001>

<llo_original>
// kernel: tpu_custom_call.1
$region0: #{tpu_custom_call.1}
  #allocation0 [shape = 'u32[]', space=smem, size = 0x4, offset = 0x4, fixed_abs, tag = 'smem constant byte address 0x4 - core index']
  #allocation1 [shape = 'u32[144,128]{1,0:T(1,128)}', space=vmem, size = 0x12000, scoped, tag = 'internal scratch']
  #allocation2 [shape = 'f32[1,1]{1,0:T(1,128)S(6)}', space=smem, size = 0x200, scoped, tag = 'scoped memory for tpu_custom_call.1']
  %s0 = inlined_call_operand.vmem [shape: f32[8,32], index: 0, kind: input, shape index: {}]
  %s1 = inlined_call_operand.vmem [shape: f32[8,32], index: 1, kind: input, shape index: {}]
  %s2 = inlined_call_operand.vmem [shape: f32[32,128], index: 2, kind: input, shape index: {}]
  %s3 = inlined_call_operand.vmem [shape: f32[32,128], index: 3, kind: input, shape index: {}]
  %s4 = inlined_call_operand.vmem [shape: f32[1,128], index: 4, kind: input, shape index: {}]
  %s5 = inlined_call_operand.vmem [shape: f32[128,1], index: 5, kind: input, shape index: {}]
  %s6 = inlined_call_operand.<no memory space> [shape: f32[1,1], index: 6, kind: input, shape index: {}]
  %s7 = inlined_call_operand.hbm [shape: f32[1,8], index: 7, kind: output, shape index: {}]
  %s8 = sld [smem:[#allocation0]]
  $region38: #{tpu_custom_call.1} parent=0
    _
  %s10 = ssub.s32 1, %s8
  %s11 = scalar_select 0, %s10, %s8
  %12 = sst [smem:[#allocation2]] %s6
  $region1: #{tpu_custom_call.1} parent=0
    #allocation3 [shape = 'u8[512]{0}', space=vmem, size = 0x400, scoped, tag = 'output window, operand 0, single buffered']
    #allocation4 [shape = 's32[1]{0}', space=sflag, size = 0x4, scoped, tag = 'scoped memory for tpu_custom_call.1']
    %13 = vsyncpa [#allocation4], 0
    // Predicated region
    $region2: #{tpu_custom_call.1} parent=1 // pred_check
      _
    $region3: #{tpu_custom_call.1} parent=1 // pred_check_branch
      %15 = sbr.rel (0) target = $region5
    $region4: #{tpu_custom_call.1} parent=1 // pred_region
      _
    $region5: #{tpu_custom_call.1} parent=1 // pred_fallthru
      _
    // Predicated region
    $region6: #{tpu_custom_call.1} parent=1 // pred_check
      _
    $region7: #{tpu_custom_call.1} parent=1 // pred_check_branch
      %17 = sbr.rel (0) target = $region9
    $region8: #{tpu_custom_call.1} parent=1 // pred_region
      _
    $region9: #{tpu_custom_call.1} parent=1 // pred_fallthru
      _
    // Predicated region
    $region10: #{tpu_custom_call.1} parent=1 // pred_check
      _
    $region11: #{tpu_custom_call.1} parent=1 // pred_check_branch
      %19 = sbr.rel (0) target = $region13
    $region12: #{tpu_custom_call.1} parent=1 // pred_region
      _
    $region13: #{tpu_custom_call.1} parent=1 // pred_fallthru
      _
    // Predicated region
    $region14: #{tpu_custom_call.1} parent=1 // pred_check
      _
    $region15: #{tpu_custom_call.1} parent=1 // pred_check_branch
      %21 = sbr.rel (0) target = $region17
    $region16: #{tpu_custom_call.1} parent=1 // pred_region
      _
    $region17: #{tpu_custom_call.1} parent=1 // pred_fallthru
      _
    // Predicated region
    $region18: #{tpu_custom_call.1} parent=1 // pred_check
      _
    $region19: #{tpu_custom_call.1} parent=1 // pred_check_branch
      %23 = sbr.rel (0) target = $region21
    $region20: #{tpu_custom_call.1} parent=1 // pred_region
      _
    $region21: #{tpu_custom_call.1} parent=1 // pred_fallthru
      _
    // Predicated region
    $region22: #{tpu_custom_call.1} parent=1 // pred_check
      _
    $region23: #{tpu_custom_call.1} parent=1 // pred_check_branch
      %25 = sbr.rel (0) target = $region25
    $region24: #{tpu_custom_call.1} parent=1 // pred_region
      _
    $region25: #{tpu_custom_call.1} parent=1 // pred_fallthru
      _
    // Predicated region
    $region26: #{tpu_custom_call.1} parent=1 // pred_check
      _
    $region27: #{tpu_custom_call.1} parent=1 // pred_check_branch
      %27 = sbr.rel (0) target = $region29
    $region28: #{tpu_custom_call.1} parent=1 // pred_region
      _
    $region29: #{tpu_custom_call.1} parent=1 // pred_fallthru
      _
    %v28 = vld [vmem:[%s0] sm:$0xff]
    %v29 = vld [vmem:[%s2] sm:$0xff]
    %v30 = vld [vmem:[%s2 + $0x8] sm:$0xff]
    %v31 = vld [vmem:[%s2 + $0x10] sm:$0xff]
    %v32 = vld [vmem:[%s2 + $0x18] sm:$0xff]
    %v33 = vld [vmem:[%s1] sm:$0xff]
    %v34 = vld [vmem:[%s3] sm:$0xff]
    %v35 = vld [vmem:[%s3 + $0x8] sm:$0xff]
    %v36 = vld [vmem:[%s3 + $0x10] sm:$0xff]
    %v37 = vld [vmem:[%s3 + $0x18] sm:$0xff]
    %vm38 = vcmask 261120
    %v40 = vsel %vm38, %v33, 0
    %42 = vmatprep.subr.mxu0 0.0
    %43 = vmatpush1.msra.mxu0 %v34
    %44 = vmatprep.subr.mxu0 0.0
    %45 = vmatpush1.msra.mxu0 %v35
    %46 = vmatprep.subr.mxu0 0.0
    %47 = vmatpush1.msra.mxu0 %v36
    %48 = vmatprep.subr.mxu0 0.0
    %49 = vmatpush1.msra.mxu0 %v37
    %50 = vmatprep.subr.mxu0 0.0
    %51 = vmatpush1.msra.mxu0 0.0
    %52 = vmatprep.subr.mxu0 0.0
    %53 = vmatpush1.msra.mxu0 0.0
    %54 = vmatprep.subr.mxu0 0.0
    %55 = vmatpush1.msra.mxu0 0.0
    %56 = vmatprep.subr.mxu0 0.0
    %57 = vmatpush1.msra.mxu0 0.0
    %58 = vmatprep.subr.mxu0 0.0
    %59 = vmatpush1.msra.mxu0 0.0
    %60 = vmatprep.subr.mxu0 0.0
    %61 = vmatpush1.msra.mxu0 0.0
    %62 = vmatprep.subr.mxu0 0.0
    %63 = vmatpush1.msra.mxu0 0.0
    %64 = vmatprep.subr.mxu0 0.0
    %65 = vmatpush1.msra.mxu0 0.0
    %66 = vmatprep.subr.mxu0 0.0
    %67 = vmatpush1.msra.mxu0 0.0
    %68 = vmatprep.subr.mxu0 0.0
    %69 = vmatpush1.msra.mxu0 0.0
    %70 = vmatprep.subr.mxu0 0.0
    %71 = vmatpush1.msra.mxu0 0.0
    %72 = vmatprep.subr.mxu0 0.0
    %73 = vmatpush1.msra.mxu0 0.0
    %74 = vmatprep.subr.mxu0 0.0
    %75 = vmatpush1.msra.mxu0 0.0
    %76 = vmatprep.subr.mxu0 0.0
    %77 = vmatpush1.msra.mxu0 0.0
    %78 = vmatprep.subr.mxu0 0.0
    %79 = vmatpush1.msra.mxu0 0.0
    %80 = vmatprep.subr.mxu0 0.0
    %81 = vmatpush1.msra.mxu0 0.0
    %82 = vmatprep.subr.mxu0 0.0
    %83 = vmatpush1.msra.mxu0 0.0
    %84 = vmatprep.subr.mxu0 0.0
    %85 = vmatpush1.msra.mxu0 0.0
    %86 = vmatprep.subr.mxu0 0.0
    %87 = vmatpush1.msra.mxu0 0.0
    %88 = vmatprep.subr.mxu0 0.0
    %89 = vmatpush1.msra.mxu0 0.0
    %90 = vmatprep.subr.mxu0 0.0
    %91 = vmatpush1.msra.mxu0 0.0
    %92 = vmatprep.subr.mxu0 0.0
    %93 = vmatpush1.msra.mxu0 0.0
    %94 = vmatprep.subr.mxu0 0.0
    %95 = vmatpush1.msra.mxu0 0.0
    %96 = vmatprep.subr.mxu0 0.0
    %97 = vmatpush1.msra.mxu0 0.0
    %98 = vmatprep.subr.mxu0 0.0
    %99 = vmatpush1.msra.mxu0 0.0
    %100 = vmatprep.subr.mxu0 0.0
    %101 = vmatpush1.msra.mxu0 0.0
    %102 = vmatprep.subr.mxu0 0.0
    %103 = vmatpush1.msra.mxu0 0.0
    %104 = vmatprep.subr.mxu0 0.0
    %105 = vmatpush1.msra.mxu0 0.0
    %106 = vmatprep.mubr.f32.mxu0 0.0
    %107 = vmatmul.mubr.f32.gmra.mrb[0].mxu0 %v40
    %v108 = vpop.f32.mrb[0].mxu0
    %v109 = vadd.f32 0.0, %v108
    %v110 = vpop.f32.mrb[0].mxu0
    %111 = vdwg.mxu0
    %v113 = vsel %vm38, %v28, 0
    %115 = vmatprep.subr.mxu0 0.0
    %116 = vmatpush1.msra.mxu0 %v29
    %117 = vmatprep.subr.mxu0 0.0
    %118 = vmatpush1.msra.mxu0 %v30
    %119 = vmatprep.subr.mxu0 0.0
    %120 = vmatpush1.msra.mxu0 %v31
    %121 = vmatprep.subr.mxu0 0.0
    %122 = vmatpush1.msra.mxu0 %v32
    %123 = vmatprep.subr.mxu0 0.0
    %124 = vmatpush1.msra.mxu0 0.0
    %125 = vmatprep.subr.mxu0 0.0
    %126 = vmatpush1.msra.mxu0 0.0
    %127 = vmatprep.subr.mxu0 0.0
    %128 = vmatpush1.msra.mxu0 0.0
    %129 = vmatprep.subr.mxu0 0.0
    %130 = vmatpush1.msra.mxu0 0.0
    %131 = vmatprep.subr.mxu0 0.0
    %132 = vmatpush1.msra.mxu0 0.0
    %133 = vmatprep.subr.mxu0 0.0
    %134 = vmatpush1.msra.mxu0 0.0
    %135 = vmatprep.subr.mxu0 0.0
    %136 = vmatpush1.msra.mxu0 0.0
    %137 = vmatprep.subr.mxu0 0.0
    %138 = vmatpush1.msra.mxu0 0.0
    %139 = vmatprep.subr.mxu0 0.0
    %140 = vmatpush1.msra.mxu0 0.0
    %141 = vmatprep.subr.mxu0 0.0
    %142 = vmatpush1.msra.mxu0 0.0
    %143 = vmatprep.subr.mxu0 0.0
    %144 = vmatpush1.msra.mxu0 0.0
    %145 = vmatprep.subr.mxu0 0.0
    %146 = vmatpush1.msra.mxu0 0.0
    %147 = vmatprep.subr.mxu0 0.0
    %148 = vmatpush1.msra.mxu0 0.0
    %149 = vmatprep.subr.mxu0 0.0
    %150 = vmatpush1.msra.mxu0 0.0
    %151 = vmatprep.subr.mxu0 0.0
    %152 = vmatpush1.msra.mxu0 0.0
    %153 = vmatprep.subr.mxu0 0.0
    %154 = vmatpush1.msra.mxu0 0.0
    %155 = vmatprep.subr.mxu0 0.0
    %156 = vmatpush1.msra.mxu0 0.0
    %157 = vmatprep.subr.mxu0 0.0
    %158 = vmatpush1.msra.mxu0 0.0
    %159 = vmatprep.subr.mxu0 0.0
    %160 = vmatpush1.msra.mxu0 0.0
    %161 = vmatprep.subr.mxu0 0.0
    %162 = vmatpush1.msra.mxu0 0.0
    %163 = vmatprep.subr.mxu0 0.0
    %164 = vmatpush1.msra.mxu0 0.0
    %165 = vmatprep.subr.mxu0 0.0
    %166 = vmatpush1.msra.mxu0 0.0
    %167 = vmatprep.subr.mxu0 0.0
    %168 = vmatpush1.msra.mxu0 0.0
    %169 = vmatprep.subr.mxu0 0.0
    %170 = vmatpush1.msra.mxu0 0.0
    %171 = vmatprep.subr.mxu0 0.0
    %172 = vmatpush1.msra.mxu0 0.0
    %173 = vmatprep.subr.mxu0 0.0
    %174 = vmatpush1.msra.mxu0 0.0
    %175 = vmatprep.subr.mxu0 0.0
    %176 = vmatpush1.msra.mxu0 0.0
    %177 = vmatprep.subr.mxu0 0.0
    %178 = vmatpush1.msra.mxu0 0.0
    %179 = vmatprep.mubr.f32.mxu0 0.0
    %180 = vmatmul.mubr.f32.gmra.mrb[0].mxu0 %v113
    %v181 = vpop.f32.mrb[0].mxu0
    %v182 = vadd.f32 %v109, %v181
    %v183 = vpop.f32.mrb[0].mxu0
    %184 = vdwg.mxu0
    %v185 = vld [vmem:[%s4] sm:$0x1]
    %v187 = vlaneseq
    %v188 = vshrl.u32 %v187, 7
    %v189 = vsub.s32 0, %v188
    %v190 = vrot.slane %v185, %v189
    %v192 = vadd.f32 %v182, %v190
    %v193 = vmax.f32 %v192, 0.0
    %v194 = vld [vmem:[%s5] sm:$0xff]
    %v195 = vld [vmem:[%s5 + $0x8] sm:$0xff]
    %v196 = vld [vmem:[%s5 + $0x10] sm:$0xff]
    %v197 = vld [vmem:[%s5 + $0x18] sm:$0xff]
    %v198 = vld [vmem:[%s5 + $0x20] sm:$0xff]
    %v199 = vld [vmem:[%s5 + $0x28] sm:$0xff]
    %v200 = vld [vmem:[%s5 + $0x30] sm:$0xff]
    %v201 = vld [vmem:[%s5 + $0x38] sm:$0xff]
    %v202 = vld [vmem:[%s5 + $0x40] sm:$0xff]
    %v203 = vld [vmem:[%s5 + $0x48] sm:$0xff]
    %v204 = vld [vmem:[%s5 + $0x50] sm:$0xff]
    %v205 = vld [vmem:[%s5 + $0x58] sm:$0xff]
    %v206 = vld [vmem:[%s5 + $0x60] sm:$0xff]
    %v207 = vld [vmem:[%s5 + $0x68] sm:$0xff]
    %v208 = vld [vmem:[%s5 + $0x70] sm:$0xff]
    %v209 = vld [vmem:[%s5 + $0x78] sm:$0xff]
    %210 = vmatprep.subr.mxu0 0.0
    %211 = vmatpush1.msra.mxu0 %v194
    %212 = vmatprep.subr.mxu0 0.0
    %213 = vmatpush1.msra.mxu0 %v195
    %214 = vmatprep.subr.mxu0 0.0
    %215 = vmatpush1.msra.mxu0 %v196
    %216 = vmatprep.subr.mxu0 0.0
    %217 = vmatpush1.msra.mxu0 %v197
    %218 = vmatprep.subr.mxu0 0.0
    %219 = vmatpush1.msra.mxu0 %v198
    %220 = vmatprep.subr.mxu0 0.0
    %221 = vmatpush1.msra.mxu0 %v199
    %222 = vmatprep.subr.mxu0 0.0
    %223 = vmatpush1.msra.mxu0 %v200
    %224 = vmatprep.subr.mxu0 0.0
    %225 = vmatpush1.msra.mxu0 %v201
    %226 = vmatprep.subr.mxu0 0.0
    %227 = vmatpush1.msra.mxu0 %v202
    %228 = vmatprep.subr.mxu0 0.0
    %229 = vmatpush1.msra.mxu0 %v203
    %230 = vmatprep.subr.mxu0 0.0
    %231 = vmatpush1.msra.mxu0 %v204
    %232 = vmatprep.subr.mxu0 0.0
    %233 = vmatpush1.msra.mxu0 %v205
    %234 = vmatprep.subr.mxu0 0.0
    %235 = vmatpush1.msra.mxu0 %v206
    %236 = vmatprep.subr.mxu0 0.0
    %237 = vmatpush1.msra.mxu0 %v207
    %238 = vmatprep.subr.mxu0 0.0
    %239 = vmatpush1.msra.mxu0 %v208
    %240 = vmatprep.subr.mxu0 0.0
    %241 = vmatpush1.msra.mxu0 %v209
    %242 = vmatprep.subr.mxu0 0.0
    %243 = vmatpush1.msra.mxu0 0.0
    %244 = vmatprep.subr.mxu0 0.0
    %245 = vmatpush1.msra.mxu0 0.0
    %246 = vmatprep.subr.mxu0 0.0
    %247 = vmatpush1.msra.mxu0 0.0
    %248 = vmatprep.subr.mxu0 0.0
    %249 = vmatpush1.msra.mxu0 0.0
    %250 = vmatprep.subr.mxu0 0.0
    %251 = vmatpush1.msra.mxu0 0.0
    %252 = vmatprep.subr.mxu0 0.0
    %253 = vmatpush1.msra.mxu0 0.0
    %254 = vmatprep.subr.mxu0 0.0
    %255 = vmatpush1.msra.mxu0 0.0
    %256 = vmatprep.subr.mxu0 0.0
    %257 = vmatpush1.msra.mxu0 0.0
    %258 = vmatprep.subr.mxu0 0.0
    %259 = vmatpush1.msra.mxu0 0.0
    %260 = vmatprep.subr.mxu0 0.0
    %261 = vmatpush1.msra.mxu0 0.0
    %262 = vmatprep.subr.mxu0 0.0
    %263 = vmatpush1.msra.mxu0 0.0
    %264 = vmatprep.subr.mxu0 0.0
    %265 = vmatpush1.msra.mxu0 0.0
    %266 = vmatprep.subr.mxu0 0.0
    %267 = vmatpush1.msra.mxu0 0.0
    %268 = vmatprep.subr.mxu0 0.0
    %269 = vmatpush1.msra.mxu0 0.0
    %270 = vmatprep.subr.mxu0 0.0
    %271 = vmatpush1.msra.mxu0 0.0
    %272 = vmatprep.subr.mxu0 0.0
    %273 = vmatpush1.msra.mxu0 0.0
    %274 = vmatprep.mubr.f32.mxu0 0.0
    %275 = vmatmul.mubr.f32.gmra.mrb[0].mxu0 %v193
    %v276 = vpop.f32.mrb[0].mxu0
    %v277 = vadd.f32 0.0, %v276
    %v278 = vpop.f32.mrb[0].mxu0
    %279 = vdwg.mxu0
    %s280 = sld [smem:[#allocation2]]
    %v281 = vstv %s280
    %v282 = vadd.f32 %v277, %v281
    %v283 = vxor.u32 %v282, 2147483648
    %v284 = vmul.f32 %v283, 1.442695
    %v285 = vpow.pop %v284
    %v286 = vadd.f32 %v285, 1.0
    %v287 = vrcp.pop %v286
    %v288 = vmul.f32 1.0, %v287
    %290 = vset.pattern.permute.xlu0 0
    %291 = vperm.xlu0 %290, %v288
    %v292 = vpop.permute.xlu0 %291
    %v293 = vlaneseq
    %v294 = vand.u32 %v293, 127
    %v295 = vlaneseq
    %v296 = vshrl.u32 %v295, 7
    %v297 = vsub.s32 %v294, %v296
    %v298 = vrot.slane %v292, %v297
    %vm300 = vcmask 57344
    %301 = vst.msk [vmem:[#allocation3] sm:$0x1] %vm300, %v298
    // Predicated region
    $region30: #{tpu_custom_call.1} parent=1 // pred_check
      _
    $region31: #{tpu_custom_call.1} parent=1 // pred_check_branch
      %303 = sbr.rel (0) target = $region33
    $region32: #{tpu_custom_call.1} parent=1 // pred_region
      %s305 = ssub.s32 16, 16
      %306 = vsyncadd [#allocation4], %s305
      %s308 = sshll.u32 [#allocation3], 4
      %s309 = int_to_ptr.vmem [resolvable:$true] %s308
      %311 = dma.vmem_to_hbm [thread:$0]  %s309, 16, %s7, [#allocation4]
    $region33: #{tpu_custom_call.1} parent=1 // pred_fallthru
      _
    // Predicated region
    $region34: #{tpu_custom_call.1} parent=1 // pred_check
      _
    $region35: #{tpu_custom_call.1} parent=1 // pred_check_branch
      %313 = sbr.rel (0) target = $region37
    $region36: #{tpu_custom_call.1} parent=1 // pred_region
      %314 = dma.done [#allocation4], 16
    $region37: #{tpu_custom_call.1} parent=1 // pred_fallthru
      _
    %315 = vsyncpa [#allocation4], 1

</llo_original>
